<compile_context>
chip_gen: v6e
topology: v6e:2x2x1
jax: 0.10.0
libtpu: 0.0.40
codegen_flags: <defaults>
</compile_context>

<pallas_src>
import math
import functools
import jax
import jax.numpy as jnp
from jax import lax
from jax.experimental import pallas as pl
from jax.experimental.pallas import tpu as pltpu


def _round_up(n, m):
    return ((n + m - 1) // m) * m


def _softplus(v):
    # Numerically stable single-exp softplus; matches PyTorch nn.Softplus
    # (beta=1, threshold=20) to well below 1e-6 absolute everywhere.
    return jnp.maximum(v, 0.0) + jnp.log1p(jnp.exp(-jnp.abs(v)))


def encoder_kernel(yx_ref, w1_ref, b1_ref, w2_ref, b2_ref, out_ref, *, z_dim):
    # Layer 1: fused fcy + fcx via a block-diagonal weight, then softplus.
    h = jnp.dot(yx_ref[...], w1_ref[...],
                preferred_element_type=jnp.float32) + b1_ref[...]
    h = _softplus(h)

    # Layer 2: fused fc21 + fc22 into one lane-padded weight.
    # Output columns: [0:Z) = z_loc, [Z:2Z) = fc22 pre-activation, rest zeros.
    o = jnp.dot(h, w2_ref[...],
                preferred_element_type=jnp.float32) + b2_ref[...]

    # Apply softplus only to the z_scale columns; store one lane-dense slab.
    col = lax.broadcasted_iota(jnp.int32, o.shape, 1)
    scale_cols = (col >= z_dim) & (col < 2 * z_dim)
    out_ref[...] = jnp.where(scale_cols, _softplus(o), o)


def encoder_forward(y, x, params, *, tm=512):
    """y: [B, y_dim], x: [B, x_dim].  Returns (z_loc, z_scale), each [B, z_dim]."""
    B, y_dim = y.shape
    _, x_dim = x.shape
    H = params["wy"].shape[0]          # PyTorch layout: (out, in)
    Z = params["w21"].shape[0]
    Din = y_dim + x_dim
    H2 = 2 * H
    Npad = _round_up(2 * Z, 128)       # lane-dense output width

    # Batch tile: multiple of 8 sublanes, never larger than the padded batch.
    tm = max(8, min(_round_up(tm, 8), _round_up(B, 8)))
    Bpad = _round_up(B, tm)
    grid = (Bpad // tm,)

    # ---- fused inputs / weights (wrapper-side layout plumbing) ----
    yx = jnp.concatenate([y, x], axis=1).astype(jnp.float32)
    if Bpad != B:
        yx = jnp.pad(yx, ((0, Bpad - B), (0, 0)))

    # Layer 1: block-diagonal (Din, 2H) so [y|x] @ W1 == [y@wy^T | x@wx^T].
    w1 = jnp.zeros((Din, H2), jnp.float32)
    w1 = w1.at[:y_dim, :H].set(params["wy"].T.astype(jnp.float32))
    w1 = w1.at[y_dim:, H:].set(params["wx"].T.astype(jnp.float32))
    b1 = jnp.concatenate([params["by"], params["bx"]]).reshape(1, H2).astype(jnp.float32)

    # Layer 2: (2H, Npad) with columns [0:Z)=w21^T, [Z:2Z)=w22^T, rest zeros.
    w2 = jnp.zeros((H2, Npad), jnp.float32)
    w2 = w2.at[:, :Z].set(params["w21"].T.astype(jnp.float32))
    w2 = w2.at[:, Z:2 * Z].set(params["w22"].T.astype(jnp.float32))
    b2 = jnp.zeros((1, Npad), jnp.float32)
    b2 = b2.at[0, :Z].set(params["b21"].astype(jnp.float32))
    b2 = b2.at[0, Z:2 * Z].set(params["b22"].astype(jnp.float32))

    # ---- VMEM budget: double-buffered activation tiles + resident weights,
    # with headroom, clamped so it is valid on v7x (64 MiB physical VMEM). ----
    tile_bytes = 2 * tm * (Din + Npad) * 4          # 2x buffered in+out tiles
    weight_bytes = (Din * H2 + H2 + H2 * Npad + Npad) * 4
    vmem_limit = min(max(4 * (tile_bytes + weight_bytes), 16 * 1024 * 1024),
                     32 * 1024 * 1024)

    def full_spec(shape):
        return pl.BlockSpec(shape, lambda i: (0, 0))

    out = pl.pallas_call(
        functools.partial(encoder_kernel, z_dim=Z),
        out_shape=jax.ShapeDtypeStruct((Bpad, Npad), jnp.float32),
        grid_spec=pltpu.PrefetchScalarGridSpec(
            num_scalar_prefetch=0,
            grid=grid,
            in_specs=[
                pl.BlockSpec((tm, Din), lambda i: (i, 0)),   # [y|x] batch tile
                full_spec((Din, H2)),                        # block-diag W1
                full_spec((1, H2)),                          # [by|bx]
                full_spec((H2, Npad)),                       # [w21^T|w22^T|0]
                full_spec((1, Npad)),                        # [b21|b22|0]
            ],
            out_specs=pl.BlockSpec((tm, Npad), lambda i: (i, 0)),
        ),
        compiler_params=pltpu.CompilerParams(
            dimension_semantics=("parallel",),
            vmem_limit_bytes=vmem_limit),
    )(yx, w1, b1, w2, b2)

    z_loc = out[:B, :Z]
    z_scale = out[:B, Z:2 * Z]
    return z_loc, z_scale


def xavier_uniform(key, out_features, in_features):
    # Matches torch.nn.init.xavier_uniform_ on a (out, in) Linear weight.
    bound = math.sqrt(6.0 / (in_features + out_features))
    return jax.random.uniform(key, (out_features, in_features),
                              minval=-bound, maxval=bound, dtype=jnp.float32)


def init_encoder_params(key, z_dim, hidden_dim, y_dim, x_dim):
    k1, k2, k3, k4 = jax.random.split(key, 4)
    return {
        "wy": xavier_uniform(k1, hidden_dim, y_dim),
        "by": jnp.zeros((hidden_dim,), jnp.float32),
        "wx": xavier_uniform(k2, hidden_dim, x_dim),
        "bx": jnp.zeros((hidden_dim,), jnp.float32),
        "w21": xavier_uniform(k3, z_dim, 2 * hidden_dim),
        "b21": jnp.zeros((z_dim,), jnp.float32),
        "w22": xavier_uniform(k4, z_dim, 2 * hidden_dim),
        "b22": jnp.zeros((z_dim,), jnp.float32),
    }


def encoder_reference(y, x, params):
    """Pure-JAX reference matching the PyTorch forward pass."""
    def sp(v):
        return jnp.logaddexp(v, 0.0)   # softplus
    hy = y @ params["wy"].T + params["by"]
    hx = x @ params["wx"].T + params["bx"]
    hidden = sp(jnp.concatenate([hy, hx], axis=1))
    z_loc = hidden @ params["w21"].T + params["b21"]
    z_scale = sp(hidden @ params["w22"].T + params["b22"])
    return z_loc, z_scale


if __name__ == "__main__":
    # Small shapes consistent with the module; B=10 exercises the
    # non-multiple-of-8 padding path.
    B, y_dim, x_dim, hidden_dim, z_dim = 10, 16, 12, 32, 8

    key = jax.random.PRNGKey(0)
    kp, ky, kx = jax.random.split(key, 3)
    params = init_encoder_params(kp, z_dim, hidden_dim, y_dim, x_dim)

    y = jax.random.normal(ky, (B, y_dim), dtype=jnp.float32)
    x = jax.random.normal(kx, (B, x_dim), dtype=jnp.float32)

    z_loc, z_scale = encoder_forward(y, x, params)
    jax.block_until_ready((z_loc, z_scale))

    # Correctness check against the pure-JAX reference.
    ref_loc, ref_scale = encoder_reference(y, x, params)
    assert z_loc.shape == (B, z_dim) and z_scale.shape == (B, z_dim)
    assert jnp.allclose(z_loc, ref_loc, atol=1e-5, rtol=1e-5)
    assert jnp.allclose(z_scale, ref_scale, atol=1e-5, rtol=1e-5)

    print("KERNEL_OK")
</pallas_src>

<mosaic_0001>
module attributes {stable_mosaic.version = 11 : i64} {
  func.func @encoder_kernel(%arg0: i32, %arg1: memref<16x28xf32, #tpu.memory_space<vmem>>, %arg2: memref<28x64xf32, #tpu.memory_space<vmem>>, %arg3: memref<1x64xf32, #tpu.memory_space<vmem>>, %arg4: memref<64x128xf32, #tpu.memory_space<vmem>>, %arg5: memref<1x128xf32, #tpu.memory_space<vmem>>, %arg6: memref<16x128xf32, #tpu.memory_space<vmem>>) attributes {dimension_semantics = [#tpu.dimension_semantics<parallel>], iteration_bounds = array<i64: 1>, scalar_prefetch = 0 : i64, scratch_operands = 0 : i64, tpu.core_type = #tpu.core_type<tc>, window_params = [{transform_indices = @transform_0, window_bounds = array<i64: 16, 28>}, {pipeline_mode = #tpu.pipeline_mode<synchronous>, transform_indices = @transform_1, window_bounds = array<i64: 28, 64>}, {pipeline_mode = #tpu.pipeline_mode<synchronous>, transform_indices = @transform_2, window_bounds = array<i64: 1, 64>}, {pipeline_mode = #tpu.pipeline_mode<synchronous>, transform_indices = @transform_3, window_bounds = array<i64: 64, 128>}, {pipeline_mode = #tpu.pipeline_mode<synchronous>, transform_indices = @transform_4, window_bounds = array<i64: 1, 128>}, {transform_indices = @transform_5, window_bounds = array<i64: 16, 128>}]} {
    %c0 = arith.constant 0 : index
    %c0_0 = arith.constant 0 : index
    %0 = vector.load %arg1[%c0, %c0_0] : memref<16x28xf32, #tpu.memory_space<vmem>>, vector<16x28xf32>
    %c0_1 = arith.constant 0 : index
    %c0_2 = arith.constant 0 : index
    %1 = vector.load %arg2[%c0_1, %c0_2] : memref<28x64xf32, #tpu.memory_space<vmem>>, vector<28x64xf32>
    %cst = arith.constant dense<0.000000e+00> : vector<16x64xf32>
    %2 = tpu.matmul %0, %1, %cst {dimension_numbers = #tpu.dot_dimension_numbers<[1], [0], [0], [1], [0, 0, 1, 1], [], []>} : vector<16x28xf32>, vector<28x64xf32>, vector<16x64xf32> -> vector<16x64xf32>
    %c0_3 = arith.constant 0 : index
    %c0_4 = arith.constant 0 : index
    %3 = vector.load %arg3[%c0_3, %c0_4] : memref<1x64xf32, #tpu.memory_space<vmem>>, vector<1x64xf32>
    %4 = vector.broadcast %3 : vector<1x64xf32> to vector<16x64xf32>
    %5 = arith.addf %2, %4 : vector<16x64xf32>
    %cst_5 = arith.constant 0.000000e+00 : f32
    %6 = vector.broadcast %cst_5 : f32 to vector<16x64xf32>
    %7 = arith.maximumf %5, %6 : vector<16x64xf32>
    %8 = math.absf %5 : vector<16x64xf32>
    %cst_6 = arith.constant 0.000000e+00 : f32
    %9 = vector.broadcast %cst_6 : f32 to vector<16x64xf32>
    %10 = arith.subf %9, %8 : vector<16x64xf32>
    %11 = math.exp %10 : vector<16x64xf32>
    %12 = math.log1p %11 : vector<16x64xf32>
    %13 = arith.addf %7, %12 : vector<16x64xf32>
    %c0_7 = arith.constant 0 : index
    %c0_8 = arith.constant 0 : index
    %14 = vector.load %arg4[%c0_7, %c0_8] : memref<64x128xf32, #tpu.memory_space<vmem>>, vector<64x128xf32>
    %cst_9 = arith.constant dense<0.000000e+00> : vector<16x128xf32>
    %15 = tpu.matmul %13, %14, %cst_9 {dimension_numbers = #tpu.dot_dimension_numbers<[1], [0], [0], [1], [0, 0, 1, 1], [], []>} : vector<16x64xf32>, vector<64x128xf32>, vector<16x128xf32> -> vector<16x128xf32>
    %c0_10 = arith.constant 0 : index
    %c0_11 = arith.constant 0 : index
    %16 = vector.load %arg5[%c0_10, %c0_11] : memref<1x128xf32, #tpu.memory_space<vmem>>, vector<1x128xf32>
    %17 = vector.broadcast %16 : vector<1x128xf32> to vector<16x128xf32>
    %18 = arith.addf %15, %17 : vector<16x128xf32>
    %19 = tpu.iota {dimensions = array<i32: 1>} : vector<16x128xi32>
    %c8_i32 = arith.constant 8 : i32
    %20 = vector.broadcast %c8_i32 : i32 to vector<16x128xi32>
    %21 = arith.cmpi sge, %19, %20 : vector<16x128xi32>
    %c16_i32 = arith.constant 16 : i32
    %22 = vector.broadcast %c16_i32 : i32 to vector<16x128xi32>
    %23 = arith.cmpi slt, %19, %22 : vector<16x128xi32>
    %24 = arith.andi %21, %23 : vector<16x128xi1>
    %cst_12 = arith.constant 0.000000e+00 : f32
    %25 = vector.broadcast %cst_12 : f32 to vector<16x128xf32>
    %26 = arith.maximumf %18, %25 : vector<16x128xf32>
    %27 = math.absf %18 : vector<16x128xf32>
    %cst_13 = arith.constant 0.000000e+00 : f32
    %28 = vector.broadcast %cst_13 : f32 to vector<16x128xf32>
    %29 = arith.subf %28, %27 : vector<16x128xf32>
    %30 = math.exp %29 : vector<16x128xf32>
    %31 = math.log1p %30 : vector<16x128xf32>
    %32 = arith.addf %26, %31 : vector<16x128xf32>
    %33 = arith.select %24, %32, %18 : vector<16x128xi1>, vector<16x128xf32>
    %c0_14 = arith.constant 0 : index
    %c0_15 = arith.constant 0 : index
    %34 = vector.load %arg6[%c0_14, %c0_15] : memref<16x128xf32, #tpu.memory_space<vmem>>, vector<16x128xf32>
    tpu.vector_store %arg6[%c0_14, %c0_15], %33 {strides = array<i32>} : memref<16x128xf32, #tpu.memory_space<vmem>>, vector<16x128xf32>,
    return
  }
  func.func @transform_0(%arg0: i32) -> (i32, i32) {
    %c0_i32 = arith.constant 0 : i32
    %c0_i32_0 = arith.constant 0 : i32
    return %arg0, %c0_i32 : i32, i32
  }
  func.func @transform_1(%arg0: i32) -> (i32, i32) {
    %c0_i32 = arith.constant 0 : i32
    %c0_i32_0 = arith.constant 0 : i32
    %c0_i32_1 = arith.constant 0 : i32
    return %c0_i32, %c0_i32_0 : i32, i32
  }
  func.func @transform_2(%arg0: i32) -> (i32, i32) {
    %c0_i32 = arith.constant 0 : i32
    %c0_i32_0 = arith.constant 0 : i32
    %c0_i32_1 = arith.constant 0 : i32
    return %c0_i32, %c0_i32_0 : i32, i32
  }
  func.func @transform_3(%arg0: i32) -> (i32, i32) {
    %c0_i32 = arith.constant 0 : i32
    %c0_i32_0 = arith.constant 0 : i32
    %c0_i32_1 = arith.constant 0 : i32
    return %c0_i32, %c0_i32_0 : i32, i32
  }
  func.func @transform_4(%arg0: i32) -> (i32, i32) {
    %c0_i32 = arith.constant 0 : i32
    %c0_i32_0 = arith.constant 0 : i32
    %c0_i32_1 = arith.constant 0 : i32
    return %c0_i32, %c0_i32_0 : i32, i32
  }
  func.func @transform_5(%arg0: i32) -> (i32, i32) {
    %c0_i32 = arith.constant 0 : i32
    %c0_i32_0 = arith.constant 0 : i32
    return %arg0, %c0_i32 : i32, i32
  }
}

</mosaic_0001>

<llo_original>
// kernel: tpu_custom_call.1
$region0: #{tpu_custom_call.1}
  #allocation0 [shape = 'u32[]', space=smem, size = 0x4, offset = 0x4, fixed_abs, tag = 'smem constant byte address 0x4 - core index']
  #allocation1 [shape = 'u32[144,128]{1,0:T(1,128)}', space=vmem, size = 0x12000, scoped, tag = 'internal scratch']
  %s0 = inlined_call_operand.hbm [shape: f32[16,28], index: 0, kind: input, shape index: {}]
  %s1 = inlined_call_operand.hbm [shape: f32[28,64], index: 1, kind: input, shape index: {}]
  %s2 = inlined_call_operand.vmem [shape: f32[1,64], index: 2, kind: input, shape index: {}]
  %s3 = inlined_call_operand.hbm [shape: f32[64,128], index: 3, kind: input, shape index: {}]
  %s4 = inlined_call_operand.vmem [shape: f32[1,128], index: 4, kind: input, shape index: {}]
  %s5 = inlined_call_operand.hbm [shape: f32[16,128], index: 5, kind: output, shape index: {}]
  %s6 = sld [smem:[#allocation0]]
  $region42: #{tpu_custom_call.1} parent=0
    _
  %s8 = ssub.s32 1, %s6
  %s9 = scalar_select 0, %s8, %s6
  $region1: #{tpu_custom_call.1} parent=0
    #allocation2 [shape = 'u8[8192]{0}', space=vmem, size = 0x2000, scoped, tag = 'input window, operand 0, single buffered']
    #allocation3 [shape = 's32[1]{0}', space=sflag, size = 0x4, scoped, tag = 'scoped memory for tpu_custom_call.1']
    #allocation4 [shape = 's32[1]{0}', space=sflag, size = 0x4, scoped, tag = 'scoped memory for tpu_custom_call.1']
    #allocation5 [shape = 'u8[16384]{0}', space=vmem, size = 0x4000, scoped, tag = 'input window, operand 1, single buffered']
    #allocation6 [shape = 's32[1]{0}', space=sflag, size = 0x4, scoped, tag = 'scoped memory for tpu_custom_call.1']
    #allocation7 [shape = 'u8[32768]{0}', space=vmem, size = 0x8000, scoped, tag = 'input window, operand 3, single buffered']
    #allocation8 [shape = 'u8[8192]{0}', space=vmem, size = 0x2000, scoped, tag = 'output window, operand 0, single buffered']
    %10 = vsyncpa [#allocation3], 0
    %11 = vsyncpa [#allocation6], 0
    %12 = vsyncpa [#allocation4], 0
    // Predicated region
    $region2: #{tpu_custom_call.1} parent=1 // pred_check
      _
    $region3: #{tpu_custom_call.1} parent=1 // pred_check_branch
      %14 = sbr.rel (0) target = $region5
    $region4: #{tpu_custom_call.1} parent=1 // pred_region
      %s16 = ssub.s32 256, 256
      %17 = vsyncadd [#allocation3], %s16
      %s18 = sshll.u32 [#allocation2], 4
      %s19 = int_to_ptr.vmem [resolvable:$true] %s18
      %24 = dma.hbm_to_vmem [thread:$0]  %s0, 256, %s19, [#allocation3], 128, 128, 8
    $region5: #{tpu_custom_call.1} parent=1 // pred_fallthru
      _
    // Predicated region
    $region6: #{tpu_custom_call.1} parent=1 // pred_check
      _
    $region7: #{tpu_custom_call.1} parent=1 // pred_check_branch
      %26 = sbr.rel (0) target = $region9
    $region8: #{tpu_custom_call.1} parent=1 // pred_region
      %s28 = ssub.s32 512, 512
      %29 = vsyncadd [#allocation6], %s28
      %s30 = sshll.u32 [#allocation5], 4
      %s31 = int_to_ptr.vmem [resolvable:$true] %s30
      %36 = dma.hbm_to_vmem [thread:$0]  %s1, 512, %s31, [#allocation6], 128, 128, 8
    $region9: #{tpu_custom_call.1} parent=1 // pred_fallthru
      _
    // Predicated region
    $region10: #{tpu_custom_call.1} parent=1 // pred_check
      _
    $region11: #{tpu_custom_call.1} parent=1 // pred_check_branch
      %38 = sbr.rel (0) target = $region13
    $region12: #{tpu_custom_call.1} parent=1 // pred_region
      _
    $region13: #{tpu_custom_call.1} parent=1 // pred_fallthru
      _
    // Predicated region
    $region14: #{tpu_custom_call.1} parent=1 // pred_check
      _
    $region15: #{tpu_custom_call.1} parent=1 // pred_check_branch
      %40 = sbr.rel (0) target = $region17
    $region16: #{tpu_custom_call.1} parent=1 // pred_region
      %s42 = ssub.s32 1024, 1024
      %43 = vsyncadd [#allocation6], %s42
      %s44 = sshll.u32 [#allocation7], 4
      %s45 = int_to_ptr.vmem [resolvable:$true] %s44
      %50 = dma.hbm_to_vmem [thread:$0]  %s3, 1024, %s45, [#allocation6], 128, 128, 8
    $region17: #{tpu_custom_call.1} parent=1 // pred_fallthru
      _
    // Predicated region
    $region18: #{tpu_custom_call.1} parent=1 // pred_check
      _
    $region19: #{tpu_custom_call.1} parent=1 // pred_check_branch
      %52 = sbr.rel (0) target = $region21
    $region20: #{tpu_custom_call.1} parent=1 // pred_region
      _
    $region21: #{tpu_custom_call.1} parent=1 // pred_fallthru
      _
    // Predicated region
    $region22: #{tpu_custom_call.1} parent=1 // pred_check
      _
    $region23: #{tpu_custom_call.1} parent=1 // pred_check_branch
      %54 = sbr.rel (0) target = $region25
    $region24: #{tpu_custom_call.1} parent=1 // pred_region
      %55 = dma.done [#allocation3], 256
    $region25: #{tpu_custom_call.1} parent=1 // pred_fallthru
      _
    // Predicated region
    $region26: #{tpu_custom_call.1} parent=1 // pred_check
      _
    $region27: #{tpu_custom_call.1} parent=1 // pred_check_branch
      %57 = sbr.rel (0) target = $region29
    $region28: #{tpu_custom_call.1} parent=1 // pred_region
      %58 = dma.done [#allocation6], 512
    $region29: #{tpu_custom_call.1} parent=1 // pred_fallthru
      _
    // Predicated region
    $region30: #{tpu_custom_call.1} parent=1 // pred_check
      _
    $region31: #{tpu_custom_call.1} parent=1 // pred_check_branch
      %60 = sbr.rel (0) target = $region33
    $region32: #{tpu_custom_call.1} parent=1 // pred_region
      %61 = dma.done [#allocation6], 1024
    $region33: #{tpu_custom_call.1} parent=1 // pred_fallthru
      _
    %v62 = vld [vmem:[#allocation2] sm:$0xff]
    %v63 = vld [vmem:[#allocation2 + $0x8] sm:$0xff]
    %v64 = vld [vmem:[#allocation5] sm:$0xff]
    %v65 = vld [vmem:[#allocation5 + $0x8] sm:$0xff]
    %v66 = vld [vmem:[#allocation5 + $0x10] sm:$0xff]
    %v67 = vld [vmem:[#allocation5 + $0x18] sm:$0xf]
    %v68 = vld [vmem:[%s2] sm:$0x1]
    %v70 = vlaneseq
    %v71 = vshrl.u32 %v70, 7
    %v72 = vsub.s32 0, %v71
    %v73 = vrot.slane %v68, %v72
    %vm75 = vcmask 228352
    %v77 = vsel %vm75, %v62, 0
    %v80 = vsel %vm75, %v63, 0
    %vm82 = vcmask 1043456
    %v84 = vsel %vm82, %v67, 0
    %86 = vmatprep.subr.mxu0 0.0
    %87 = vmatpush1.msra.mxu0 0.0
    %88 = vmatprep.subr.mxu0 0.0
    %89 = vmatpush1.msra.mxu0 0.0
    %90 = vmatprep.subr.mxu0 0.0
    %91 = vmatpush1.msra.mxu0 0.0
    %92 = vmatprep.subr.mxu0 0.0
    %93 = vmatpush1.msra.mxu0 0.0
    %94 = vmatprep.subr.mxu0 0.0
    %95 = vmatpush1.msra.mxu0 0.0
    %96 = vmatprep.subr.mxu0 0.0
    %97 = vmatpush1.msra.mxu0 0.0
    %98 = vmatprep.subr.mxu0 0.0
    %99 = vmatpush1.msra.mxu0 0.0
    %100 = vmatprep.subr.mxu0 0.0
    %101 = vmatpush1.msra.mxu0 0.0
    %102 = vmatprep.subr.mxu0 0.0
    %103 = vmatpush1.msra.mxu0 0.0
    %104 = vmatprep.subr.mxu0 0.0
    %105 = vmatpush1.msra.mxu0 0.0
    %106 = vmatprep.subr.mxu0 0.0
    %107 = vmatpush1.msra.mxu0 0.0
    %108 = vmatprep.subr.mxu0 0.0
    %109 = vmatpush1.msra.mxu0 0.0
    %110 = vmatprep.subr.mxu0 0.0
    %111 = vmatpush1.msra.mxu0 %v84
    %112 = vmatprep.subr.mxu0 0.0
    %113 = vmatpush1.msra.mxu0 %v66
    %114 = vmatprep.subr.mxu0 0.0
    %115 = vmatpush1.msra.mxu0 %v65
    %116 = vmatprep.subr.mxu0 0.0
    %117 = vmatpush1.msra.mxu0 %v64
    %118 = vmatprep.subr.mxu0 0.0
    %119 = vmatpush2.msra.mxu0 0.0
    %120 = vmatprep.subr.mxu0 0.0
    %121 = vmatpush2.msra.mxu0 0.0
    %122 = vmatprep.subr.mxu0 0.0
    %123 = vmatpush2.msra.mxu0 0.0
    %124 = vmatprep.subr.mxu0 0.0
    %125 = vmatpush2.msra.mxu0 0.0
    %126 = vmatprep.subr.mxu0 0.0
    %127 = vmatpush2.msra.mxu0 0.0
    %128 = vmatprep.subr.mxu0 0.0
    %129 = vmatpush2.msra.mxu0 0.0
    %130 = vmatprep.subr.mxu0 0.0
    %131 = vmatpush2.msra.mxu0 0.0
    %132 = vmatprep.subr.mxu0 0.0
    %133 = vmatpush2.msra.mxu0 0.0
    %134 = vmatprep.subr.mxu0 0.0
    %135 = vmatpush2.msra.mxu0 0.0
    %136 = vmatprep.subr.mxu0 0.0
    %137 = vmatpush2.msra.mxu0 0.0
    %138 = vmatprep.subr.mxu0 0.0
    %139 = vmatpush2.msra.mxu0 0.0
    %140 = vmatprep.subr.mxu0 0.0
    %141 = vmatpush2.msra.mxu0 0.0
    %142 = vmatprep.subr.mxu0 0.0
    %143 = vmatpush2.msra.mxu0 0.0
    %144 = vmatprep.subr.mxu0 0.0
    %145 = vmatpush2.msra.mxu0 0.0
    %146 = vmatprep.subr.mxu0 0.0
    %147 = vmatpush2.msra.mxu0 0.0
    %148 = vmatprep.subr.mxu0 0.0
    %149 = vmatpush2.msra.mxu0 0.0
    %150 = vmatprep.mubr.f32.mxu0 0.0
    %151 = vmatmul.mubr.f32.gmra.mxu0 %v77
    %v152 = vpop.f32.mrf.mxu0
    %v153 = vadd.f32 %v73, %v152
    %v154 = vpop.f32.mrf.mxu0
    %155 = vmatprep.mubr.f32.mxu0 0.0
    %156 = vmatmul.mubr.f32.gmra.mxu0 %v80
    %v157 = vpop.f32.mrf.mxu0
    %v158 = vadd.f32 %v73, %v157
    %v159 = vpop.f32.mrf.mxu0
    %160 = vdwg.mxu0
    %v161 = vmax.f32 %v153, 0.0
    %v162 = vmax.f32 %v158, 0.0
    %v163 = vand.u32 2147483647, %v153
    %v164 = vand.u32 2147483647, %v158
    %v165 = vsub.f32 0.0, %v163
    %v166 = vsub.f32 0.0, %v164
    %v167 = vmul.f32 %v165, 1.442695
    %v168 = vpow.pop %v167
    %v169 = vmul.f32 %v166, 1.442695
    %v170 = vpow.pop %v169
    %v171 = vadd.f32 %v168, 1.0
    %v172 = vlog2.pop %v171
    %v173 = vmul.f32 %v172, 0.6931472
    %v174 = vmul.f32 -0.5, %v168
    %v175 = vadd.f32 %v174, 1.0
    %v176 = vmul.f32 %v175, %v168
    %v177 = vand.u32 2147483647, %v168
    %vm178 = vcmp.lt.f32.partialorder %v177, 0.0004427343
    %v179 = vsel %vm178, %v176, %v173
    %v180 = vadd.f32 %v170, 1.0
    %v181 = vlog2.pop %v180
    %v182 = vmul.f32 %v181, 0.6931472
    %v183 = vmul.f32 -0.5, %v170
    %v184 = vadd.f32 %v183, 1.0
    %v185 = vmul.f32 %v184, %v170
    %v186 = vand.u32 2147483647, %v170
    %vm187 = vcmp.lt.f32.partialorder %v186, 0.0004427343
    %v188 = vsel %vm187, %v185, %v182
    %v189 = vadd.f32 %v161, %v179
    %v190 = vadd.f32 %v162, %v188
    %v191 = vld [vmem:[#allocation7] sm:$0xff]
    %v192 = vld [vmem:[#allocation7 + $0x8] sm:$0xff]
    %v193 = vld [vmem:[#allocation7 + $0x10] sm:$0xff]
    %v194 = vld [vmem:[#allocation7 + $0x18] sm:$0xff]
    %v195 = vld [vmem:[#allocation7 + $0x20] sm:$0xff]
    %v196 = vld [vmem:[#allocation7 + $0x28] sm:$0xff]
    %v197 = vld [vmem:[#allocation7 + $0x30] sm:$0xff]
    %v198 = vld [vmem:[#allocation7 + $0x38] sm:$0xff]
    %v199 = vld [vmem:[%s4] sm:$0x1]
    %v201 = vlaneseq
    %v202 = vshrl.u32 %v201, 7
    %v203 = vsub.s32 0, %v202
    %v204 = vrot.slane %v199, %v203
    %vm206 = vcmask 523264
    %v208 = vsel %vm206, %v189, 0
    %v211 = vsel %vm206, %v190, 0
    %213 = vmatprep.subr.mxu0 0.0
    %214 = vmatpush1.msra.mxu0 0.0
    %215 = vmatprep.subr.mxu0 0.0
    %216 = vmatpush1.msra.mxu0 0.0
    %217 = vmatprep.subr.mxu0 0.0
    %218 = vmatpush1.msra.mxu0 0.0
    %219 = vmatprep.subr.mxu0 0.0
    %220 = vmatpush1.msra.mxu0 0.0
    %221 = vmatprep.subr.mxu0 0.0
    %222 = vmatpush1.msra.mxu0 0.0
    %223 = vmatprep.subr.mxu0 0.0
    %224 = vmatpush1.msra.mxu0 0.0
    %225 = vmatprep.subr.mxu0 0.0
    %226 = vmatpush1.msra.mxu0 0.0
    %227 = vmatprep.subr.mxu0 0.0
    %228 = vmatpush1.msra.mxu0 0.0
    %229 = vmatprep.subr.mxu0 0.0
    %230 = vmatpush1.msra.mxu0 %v198
    %231 = vmatprep.subr.mxu0 0.0
    %232 = vmatpush1.msra.mxu0 %v197
    %233 = vmatprep.subr.mxu0 0.0
    %234 = vmatpush1.msra.mxu0 %v196
    %235 = vmatprep.subr.mxu0 0.0
    %236 = vmatpush1.msra.mxu0 %v195
    %237 = vmatprep.subr.mxu0 0.0
    %238 = vmatpush1.msra.mxu0 %v194
    %239 = vmatprep.subr.mxu0 0.0
    %240 = vmatpush1.msra.mxu0 %v193
    %241 = vmatprep.subr.mxu0 0.0
    %242 = vmatpush1.msra.mxu0 %v192
    %243 = vmatprep.subr.mxu0 0.0
    %244 = vmatpush1.msra.mxu0 %v191
    %245 = vmatprep.subr.mxu0 0.0
    %246 = vmatpush2.msra.mxu0 0.0
    %247 = vmatprep.subr.mxu0 0.0
    %248 = vmatpush2.msra.mxu0 0.0
    %249 = vmatprep.subr.mxu0 0.0
    %250 = vmatpush2.msra.mxu0 0.0
    %251 = vmatprep.subr.mxu0 0.0
    %252 = vmatpush2.msra.mxu0 0.0
    %253 = vmatprep.subr.mxu0 0.0
    %254 = vmatpush2.msra.mxu0 0.0
    %255 = vmatprep.subr.mxu0 0.0
    %256 = vmatpush2.msra.mxu0 0.0
    %257 = vmatprep.subr.mxu0 0.0
    %258 = vmatpush2.msra.mxu0 0.0
    %259 = vmatprep.subr.mxu0 0.0
    %260 = vmatpush2.msra.mxu0 0.0
    %261 = vmatprep.subr.mxu0 0.0
    %262 = vmatpush2.msra.mxu0 0.0
    %263 = vmatprep.subr.mxu0 0.0
    %264 = vmatpush2.msra.mxu0 0.0
    %265 = vmatprep.subr.mxu0 0.0
    %266 = vmatpush2.msra.mxu0 0.0
    %267 = vmatprep.subr.mxu0 0.0
    %268 = vmatpush2.msra.mxu0 0.0
    %269 = vmatprep.subr.mxu0 0.0
    %270 = vmatpush2.msra.mxu0 0.0
    %271 = vmatprep.subr.mxu0 0.0
    %272 = vmatpush2.msra.mxu0 0.0
    %273 = vmatprep.subr.mxu0 0.0
    %274 = vmatpush2.msra.mxu0 0.0
    %275 = vmatprep.subr.mxu0 0.0
    %276 = vmatpush2.msra.mxu0 0.0
    %277 = vmatprep.mubr.f32.mxu0 0.0
    %278 = vmatmul.mubr.f32.gmra.mxu0 %v208
    %v279 = vpop.f32.mrf.mxu0
    %v280 = vadd.f32 %v204, %v279
    %v281 = vpop.f32.mrf.mxu0
    %282 = vmatprep.mubr.f32.mxu0 0.0
    %283 = vmatmul.mubr.f32.gmra.mxu0 %v211
    %v284 = vpop.f32.mrf.mxu0
    %v285 = vadd.f32 %v204, %v284
    %v286 = vpop.f32.mrf.mxu0
    %287 = vdwg.mxu0
    %v288 = vlaneseq
    %v289 = vand.u32 %v288, 127
    %vm290 = vcmp.ge.s32.totalorder %v289, 8
    %vm291 = vcmp.lt.s32.totalorder %v289, 16
    %vm292 = vmand %vm290, %vm291
    %v293 = vmax.f32 %v280, 0.0
    %v294 = vmax.f32 %v285, 0.0
    %v295 = vand.u32 2147483647, %v280
    %v296 = vand.u32 2147483647, %v285
    %v297 = vsub.f32 0.0, %v295
    %v298 = vsub.f32 0.0, %v296
    %v299 = vmul.f32 %v297, 1.442695
    %v300 = vpow.pop %v299
    %v301 = vmul.f32 %v298, 1.442695
    %v302 = vpow.pop %v301
    %v303 = vadd.f32 %v300, 1.0
    %v304 = vlog2.pop %v303
    %v305 = vmul.f32 %v304, 0.6931472
    %v306 = vmul.f32 -0.5, %v300
    %v307 = vadd.f32 %v306, 1.0
    %v308 = vmul.f32 %v307, %v300
    %v309 = vand.u32 2147483647, %v300
    %vm310 = vcmp.lt.f32.partialorder %v309, 0.0004427343
    %v311 = vsel %vm310, %v308, %v305
    %v312 = vadd.f32 %v302, 1.0
    %v313 = vlog2.pop %v312
    %v314 = vmul.f32 %v313, 0.6931472
    %v315 = vmul.f32 -0.5, %v302
    %v316 = vadd.f32 %v315, 1.0
    %v317 = vmul.f32 %v316, %v302
    %v318 = vand.u32 2147483647, %v302
    %vm319 = vcmp.lt.f32.partialorder %v318, 0.0004427343
    %v320 = vsel %vm319, %v317, %v314
    %v321 = vadd.f32 %v293, %v311
    %v322 = vadd.f32 %v294, %v320
    %v323 = vsel %vm292, %v321, %v280
    %v324 = vsel %vm292, %v322, %v285
    %325 = vst [vmem:[#allocation8] sm:$0xff] %v323
    %326 = vst [vmem:[#allocation8 + $0x8] sm:$0xff] %v324
    // Predicated region
    $region34: #{tpu_custom_call.1} parent=1 // pred_check
      _
    $region35: #{tpu_custom_call.1} parent=1 // pred_check_branch
      %328 = sbr.rel (0) target = $region37
    $region36: #{tpu_custom_call.1} parent=1 // pred_region
      %s330 = ssub.s32 256, 256
      %331 = vsyncadd [#allocation4], %s330
      %s332 = sshll.u32 [#allocation8], 4
      %s333 = int_to_ptr.vmem [resolvable:$true] %s332
      %338 = dma.vmem_to_hbm [thread:$0]  %s333, 256, %s5, [#allocation4], 128, 128, 8
    $region37: #{tpu_custom_call.1} parent=1 // pred_fallthru
      _
    // Predicated region
    $region38: #{tpu_custom_call.1} parent=1 // pred_check
      _
    $region39: #{tpu_custom_call.1} parent=1 // pred_check_branch
      %340 = sbr.rel (0) target = $region41
    $region40: #{tpu_custom_call.1} parent=1 // pred_region
      %341 = dma.done [#allocation4], 256
    $region41: #{tpu_custom_call.1} parent=1 // pred_fallthru
      _
    %342 = vsyncpa [#allocation3], 1
    %343 = vsyncpa [#allocation6], 1
    %344 = vsyncpa [#allocation4], 1

</llo_original>
